<compile_context>
chip_gen: v6e
topology: v6e:2x2x1
jax: 0.10.0
libtpu: 0.0.40
codegen_flags: <defaults>
</compile_context>

<pallas_src>
import functools

import jax
import jax.numpy as jnp
from jax.experimental import pallas as pl
from jax.experimental.pallas import tpu as pltpu


DEFAULT_TM = 256
DEFAULT_TN = 512
DEFAULT_TK = 1024


def _round_up(x, m):
    return ((x + m - 1) // m) * m


def _linear_kernel(x_ref, w_ref, o_ref, acc_ref):
    # x_ref:   (tm, tk)  activation tile
    # w_ref:   (tk, tn)  weight tile, pre-transposed (n_input, n_output) layout
    # o_ref:   (tm, tn)  output tile
    # acc_ref: (tm, tn)  f32 accumulator scratch (persists across the K axis)
    k = pl.program_id(2)

    @pl.when(k == 0)
    def _():
        acc_ref[...] = jnp.zeros_like(acc_ref)

    acc_ref[...] += jnp.dot(
        x_ref[...], w_ref[...], preferred_element_type=jnp.float32
    )

    @pl.when(k == pl.num_programs(2) - 1)
    def _():
        o_ref[...] = acc_ref[...].astype(o_ref.dtype)


def prepare_classifier_weight(weight, *, tn=DEFAULT_TN, tk=DEFAULT_TK, dtype=None):
    """One-time parameter prep (do NOT call per forward pass).

    weight: (n_output, n_input)  PyTorch nn.Linear layout.
    Returns (w_t, meta) where w_t is the zero-padded, transposed (Kp, Np)
    weight (optionally cast to `dtype`, e.g. jnp.bfloat16 for bandwidth-bound
    heads) and meta carries the static shapes/tile sizes for the forward.
    """
    N, K = weight.shape
    tn = min(tn, _round_up(N, 128))   # lane dim of the output -> multiple of 128
    tk = min(tk, _round_up(K, 128))   # reduction dim -> multiple of 128
    Np = _round_up(N, tn)
    Kp = _round_up(K, tk)
    wp = weight
    if Np != N or Kp != K:
        wp = jnp.pad(weight, ((0, Np - N), (0, Kp - K)))
    w_t = wp.T  # (Kp, Np): canonical (K, N) matmul layout, lane-dense on N
    if dtype is not None:
        w_t = w_t.astype(dtype)
    meta = dict(n_output=N, n_input=K, tn=tn, tk=tk)
    return w_t, meta


@functools.partial(
    jax.jit, static_argnames=("n_output", "n_input", "tn", "tk", "tm")
)
def nn_classifier_forward(x, w_t, *, n_output, n_input, tn, tk, tm=DEFAULT_TM):
    """y = x @ W^T using the pre-prepared (Kp, Np) weight.

    x:   (B, n_input)
    w_t: (Kp, Np) padded/transposed weight from prepare_classifier_weight
    returns (B, n_output) in x's original dtype.
    """
    M, K = x.shape
    Kp, Np = w_t.shape
    assert K == n_input, f"n_input mismatch: {K} vs {n_input}"
    assert Kp % tk == 0 and Np % tn == 0

    out_dtype = x.dtype

    # Stream activations in the weight's dtype (bf16 if the head was prepped
    # that way); accumulation stays f32 inside the kernel.
    if x.dtype != w_t.dtype:
        x = x.astype(w_t.dtype)

    # Sublane packing: 8 rows/vreg for 32-bit, 16 for bf16.
    sub = 16 if w_t.dtype == jnp.dtype(jnp.bfloat16) else 8

    # Minimize M over-padding: keep the same number of M blocks as a fixed
    # tm would give, but shrink the tile to the smallest sublane-aligned size
    # that covers M (M=260 -> tm=136, Mp=272 instead of 512).
    n_m_blocks = max(1, -(-M // tm))
    tm_eff = min(tm, _round_up(-(-M // n_m_blocks), sub))
    Mp = _round_up(M, tm_eff)

    xp = x
    if Mp != M or Kp != K:
        xp = jnp.pad(x, ((0, Mp - M), (0, Kp - K)))

    grid = (Mp // tm_eff, Np // tn, Kp // tk)

    # VMEM budget: double-buffered inputs + output + f32 accumulator, with 2x
    # headroom, capped at 48 MiB (v7x has only 64 MiB physical per TC).
    itemsize = jnp.dtype(w_t.dtype).itemsize
    vmem_est = (
        2 * (tm_eff * tk + tk * tn) * itemsize        # x + w double buffers
        + 2 * tm_eff * tn * jnp.dtype(out_dtype).itemsize  # out double buffer
        + tm_eff * tn * 4                              # f32 accumulator
    )
    vmem_limit = min(max(2 * vmem_est, 8 << 20), 48 << 20)

    cost = pl.CostEstimate(
        flops=2 * M * n_output * K,
        bytes_accessed=itemsize * (M * K + K * n_output)
        + jnp.dtype(out_dtype).itemsize * M * n_output,
        transcendentals=0,
    )

    out = pl.pallas_call(
        _linear_kernel,
        out_shape=jax.ShapeDtypeStruct((Mp, Np), out_dtype),
        grid_spec=pltpu.PrefetchScalarGridSpec(
            num_scalar_prefetch=0,
            grid=grid,
            in_specs=[
                pl.BlockSpec((tm_eff, tk), lambda i, j, k: (i, k)),  # x tile
                pl.BlockSpec((tk, tn), lambda i, j, k: (k, j)),      # W^T tile
            ],
            out_specs=pl.BlockSpec((tm_eff, tn), lambda i, j, k: (i, j)),
            scratch_shapes=[pltpu.VMEM((tm_eff, tn), jnp.float32)],
        ),
        compiler_params=pltpu.CompilerParams(
            dimension_semantics=("parallel", "parallel", "arbitrary"),
            vmem_limit_bytes=vmem_limit,
        ),
        cost_estimate=cost,
    )(xp, w_t)

    if Mp == M and Np == n_output:
        return out
    return out[:M, :n_output]


if __name__ == "__main__":
    # Small shapes consistent with the module: n_input=32, n_output=16, batch=8
    B, n_input, n_output = 8, 32, 16

    key = jax.random.PRNGKey(0)
    kx, kw = jax.random.split(key)
    x = jax.random.normal(kx, (B, n_input), dtype=jnp.float32)
    # Deterministic init mimicking nn.Linear default (uniform in +/- 1/sqrt(n_input))
    bound = 1.0 / jnp.sqrt(jnp.float32(n_input))
    weight = jax.random.uniform(
        kw, (n_output, n_input), dtype=jnp.float32, minval=-bound, maxval=bound
    )

    # One-time param prep (pad + transpose); NOT on the per-call path.
    w_t, meta = prepare_classifier_weight(weight)
    w_t = jax.block_until_ready(w_t)

    out = nn_classifier_forward(x, w_t, **meta)
    out = jax.block_until_ready(out)

    # Correctness check against plain JAX reference (y = x @ W^T)
    ref = x @ weight.T
    assert out.shape == (B, n_output)
    assert jnp.allclose(out, ref, atol=1e-5, rtol=1e-5)

    print("KERNEL_OK")
</pallas_src>

<mosaic_0001>
module attributes {stable_mosaic.version = 11 : i64} {
  func.func @_linear_kernel(%arg0: i32, %arg1: i32, %arg2: i32, %arg3: memref<8x128xf32, #tpu.memory_space<vmem>>, %arg4: memref<128x128xf32, #tpu.memory_space<vmem>>, %arg5: memref<8x128xf32, #tpu.memory_space<vmem>>, %arg6: memref<8x128xf32, #tpu.memory_space<vmem>>) attributes {dimension_semantics = [#tpu.dimension_semantics<parallel>, #tpu.dimension_semantics<parallel>, #tpu.dimension_semantics<arbitrary>], iteration_bounds = array<i64: 1, 1, 1>, scalar_prefetch = 0 : i64, scratch_operands = 1 : i64, tpu.core_type = #tpu.core_type<tc>, window_params = [{transform_indices = @transform_0, window_bounds = array<i64: 8, 128>}, {transform_indices = @transform_1, window_bounds = array<i64: 128, 128>}, {transform_indices = @transform_2, window_bounds = array<i64: 8, 128>}]} {
    %c0_i32 = arith.constant 0 : i32
    %0 = arith.cmpi eq, %arg2, %c0_i32 : i32
    %1 = arith.extui %0 : i1 to i32
    %c0_i32_0 = arith.constant 0 : i32
    %2 = arith.cmpi ne, %1, %c0_i32_0 : i32
    scf.if %2 {
      %cst_10 = arith.constant 0.000000e+00 : f32
      %12 = vector.broadcast %cst_10 : f32 to vector<8x128xf32>
      %c0_11 = arith.constant 0 : index
      %c0_12 = arith.constant 0 : index
      %13 = vector.load %arg6[%c0_11, %c0_12] : memref<8x128xf32, #tpu.memory_space<vmem>>, vector<8x128xf32>
      tpu.vector_store %arg6[%c0_11, %c0_12], %12 {strides = array<i32>} : memref<8x128xf32, #tpu.memory_space<vmem>>, vector<8x128xf32>,
    } else {
    }
    %c0 = arith.constant 0 : index
    %c0_1 = arith.constant 0 : index
    %3 = vector.load %arg6[%c0, %c0_1] : memref<8x128xf32, #tpu.memory_space<vmem>>, vector<8x128xf32>
    %c0_2 = arith.constant 0 : index
    %c0_3 = arith.constant 0 : index
    %4 = vector.load %arg3[%c0_2, %c0_3] : memref<8x128xf32, #tpu.memory_space<vmem>>, vector<8x128xf32>
    %c0_4 = arith.constant 0 : index
    %c0_5 = arith.constant 0 : index
    %5 = vector.load %arg4[%c0_4, %c0_5] : memref<128x128xf32, #tpu.memory_space<vmem>>, vector<128x128xf32>
    %cst = arith.constant dense<0.000000e+00> : vector<8x128xf32>
    %6 = tpu.matmul %4, %5, %cst {dimension_numbers = #tpu.dot_dimension_numbers<[1], [0], [0], [1], [0, 0, 1, 1], [], []>} : vector<8x128xf32>, vector<128x128xf32>, vector<8x128xf32> -> vector<8x128xf32>
    %7 = arith.addf %3, %6 : vector<8x128xf32>
    %c0_6 = arith.constant 0 : index
    %c0_7 = arith.constant 0 : index
    %8 = vector.load %arg6[%c0_6, %c0_7] : memref<8x128xf32, #tpu.memory_space<vmem>>, vector<8x128xf32>
    tpu.vector_store %arg6[%c0_6, %c0_7], %7 {strides = array<i32>} : memref<8x128xf32, #tpu.memory_space<vmem>>, vector<8x128xf32>,
    %c0_i32_8 = arith.constant 0 : i32
    %9 = arith.cmpi eq, %arg2, %c0_i32_8 : i32
    %10 = arith.extui %9 : i1 to i32
    %c0_i32_9 = arith.constant 0 : i32
    %11 = arith.cmpi ne, %10, %c0_i32_9 : i32
    scf.if %11 {
      %c0_10 = arith.constant 0 : index
      %c0_11 = arith.constant 0 : index
      %12 = vector.load %arg6[%c0_10, %c0_11] : memref<8x128xf32, #tpu.memory_space<vmem>>, vector<8x128xf32>
      %c0_12 = arith.constant 0 : index
      %c0_13 = arith.constant 0 : index
      %13 = vector.load %arg5[%c0_12, %c0_13] : memref<8x128xf32, #tpu.memory_space<vmem>>, vector<8x128xf32>
      tpu.vector_store %arg5[%c0_12, %c0_13], %12 {strides = array<i32>} : memref<8x128xf32, #tpu.memory_space<vmem>>, vector<8x128xf32>,
    } else {
    }
    return
  }
  func.func @transform_0(%arg0: i32, %arg1: i32, %arg2: i32) -> (i32, i32) {
    %c0_i32 = arith.constant 0 : i32
    return %arg0, %arg2 : i32, i32
  }
  func.func @transform_1(%arg0: i32, %arg1: i32, %arg2: i32) -> (i32, i32) {
    %c0_i32 = arith.constant 0 : i32
    return %arg2, %arg1 : i32, i32
  }
  func.func @transform_2(%arg0: i32, %arg1: i32, %arg2: i32) -> (i32, i32) {
    %c0_i32 = arith.constant 0 : i32
    return %arg0, %arg1 : i32, i32
  }
}

</mosaic_0001>

<llo_original>
// kernel: nn_classifier_forward.1
$region0: #{nn_classifier_forward.1}
  #allocation0 [shape = 'u32[]', space=smem, size = 0x4, offset = 0x4, fixed_abs, tag = 'smem constant byte address 0x4 - core index']
  #allocation1 [shape = 'u32[144,128]{1,0:T(1,128)}', space=vmem, size = 0x12000, scoped, tag = 'internal scratch']
  #allocation2 [shape = 'f32[8,128]{1,0:T(8,128)}', space=vmem, size = 0x1000, scoped, tag = 'scratch operand']
  %s0 = inlined_call_operand.vmem [shape: f32[8,128], index: 0, kind: input, shape index: {}]
  %s1 = inlined_call_operand.hbm [shape: f32[128,128], index: 1, kind: input, shape index: {}]
  %s2 = inlined_call_operand.hbm [shape: f32[8,128], index: 2, kind: output, shape index: {}]
  %s3 = sld [smem:[#allocation0]]
  $region30: #{nn_classifier_forward.1} parent=0
    _
  %s5 = ssub.s32 1, %s3
  %s6 = scalar_select 0, %s5, %s3
  $region1: #{nn_classifier_forward.1} parent=0
    #allocation3 [shape = 'u8[65536]{0}', space=vmem, size = 0x10000, scoped, tag = 'input window, operand 1, single buffered']
    #allocation4 [shape = 's32[1]{0}', space=sflag, size = 0x4, scoped, tag = 'scoped memory for nn_classifier_forward.1']
    #allocation5 [shape = 's32[1]{0}', space=sflag, size = 0x4, scoped, tag = 'scoped memory for nn_classifier_forward.1']
    #allocation6 [shape = 'u8[4096]{0}', space=vmem, size = 0x1000, scoped, tag = 'output window, operand 0, single buffered']
    %7 = vsyncpa [#allocation4], 0
    %8 = vsyncpa [#allocation5], 0
    // Predicated region
    $region2: #{nn_classifier_forward.1} parent=1 // pred_check
      _
    $region3: #{nn_classifier_forward.1} parent=1 // pred_check_branch
      %10 = sbr.rel (0) target = $region5
    $region4: #{nn_classifier_forward.1} parent=1 // pred_region
      _
    $region5: #{nn_classifier_forward.1} parent=1 // pred_fallthru
      _
    // Predicated region
    $region6: #{nn_classifier_forward.1} parent=1 // pred_check
      _
    $region7: #{nn_classifier_forward.1} parent=1 // pred_check_branch
      %12 = sbr.rel (0) target = $region9
    $region8: #{nn_classifier_forward.1} parent=1 // pred_region
      %s14 = ssub.s32 2048, 2048
      %15 = vsyncadd [#allocation4], %s14
      %s16 = sshll.u32 [#allocation3], 4
      %s17 = int_to_ptr.vmem [resolvable:$true] %s16
      %22 = dma.hbm_to_vmem [thread:$0]  %s1, 2048, %s17, [#allocation4], 128, 128, 8
    $region9: #{nn_classifier_forward.1} parent=1 // pred_fallthru
      _
    // Predicated region
    $region10: #{nn_classifier_forward.1} parent=1 // pred_check
      _
    $region11: #{nn_classifier_forward.1} parent=1 // pred_check_branch
      %24 = sbr.rel (0) target = $region13
    $region12: #{nn_classifier_forward.1} parent=1 // pred_region
      %25 = dma.done [#allocation4], 2048
    $region13: #{nn_classifier_forward.1} parent=1 // pred_fallthru
      _
    %p26 = scmp.eq.s32.totalorder 0, 0
    // Predicated region
    $region14: #{nn_classifier_forward.1} parent=1 // pred_check
      %p27 = pneg %p26
    $region15: #{nn_classifier_forward.1} parent=1 // pred_check_branch
      %29 = sbr.rel (%p27) target = $region17
    $region16: #{nn_classifier_forward.1} parent=1 // pred_region
      %30 = vst [vmem:[#allocation2] sm:$0xff] 0.0
    $region17: #{nn_classifier_forward.1} parent=1 // pred_fallthru
      _
    %v31 = vld [vmem:[#allocation2] sm:$0xff]
    %v32 = vld [vmem:[%s0] sm:$0xff]
    %v33 = vld [vmem:[#allocation3] sm:$0xff]
    %v34 = vld [vmem:[#allocation3 + $0x8] sm:$0xff]
    %v35 = vld [vmem:[#allocation3 + $0x10] sm:$0xff]
    %v36 = vld [vmem:[#allocation3 + $0x18] sm:$0xff]
    %v37 = vld [vmem:[#allocation3 + $0x20] sm:$0xff]
    %v38 = vld [vmem:[#allocation3 + $0x28] sm:$0xff]
    %v39 = vld [vmem:[#allocation3 + $0x30] sm:$0xff]
    %v40 = vld [vmem:[#allocation3 + $0x38] sm:$0xff]
    %v41 = vld [vmem:[#allocation3 + $0x40] sm:$0xff]
    %v42 = vld [vmem:[#allocation3 + $0x48] sm:$0xff]
    %v43 = vld [vmem:[#allocation3 + $0x50] sm:$0xff]
    %v44 = vld [vmem:[#allocation3 + $0x58] sm:$0xff]
    %v45 = vld [vmem:[#allocation3 + $0x60] sm:$0xff]
    %v46 = vld [vmem:[#allocation3 + $0x68] sm:$0xff]
    %v47 = vld [vmem:[#allocation3 + $0x70] sm:$0xff]
    %v48 = vld [vmem:[#allocation3 + $0x78] sm:$0xff]
    %49 = vmatprep.subr.mxu0 0.0
    %50 = vmatpush1.msra.mxu0 %v48
    %51 = vmatprep.subr.mxu0 0.0
    %52 = vmatpush1.msra.mxu0 %v47
    %53 = vmatprep.subr.mxu0 0.0
    %54 = vmatpush1.msra.mxu0 %v46
    %55 = vmatprep.subr.mxu0 0.0
    %56 = vmatpush1.msra.mxu0 %v45
    %57 = vmatprep.subr.mxu0 0.0
    %58 = vmatpush1.msra.mxu0 %v44
    %59 = vmatprep.subr.mxu0 0.0
    %60 = vmatpush1.msra.mxu0 %v43
    %61 = vmatprep.subr.mxu0 0.0
    %62 = vmatpush1.msra.mxu0 %v42
    %63 = vmatprep.subr.mxu0 0.0
    %64 = vmatpush1.msra.mxu0 %v41
    %65 = vmatprep.subr.mxu0 0.0
    %66 = vmatpush1.msra.mxu0 %v40
    %67 = vmatprep.subr.mxu0 0.0
    %68 = vmatpush1.msra.mxu0 %v39
    %69 = vmatprep.subr.mxu0 0.0
    %70 = vmatpush1.msra.mxu0 %v38
    %71 = vmatprep.subr.mxu0 0.0
    %72 = vmatpush1.msra.mxu0 %v37
    %73 = vmatprep.subr.mxu0 0.0
    %74 = vmatpush1.msra.mxu0 %v36
    %75 = vmatprep.subr.mxu0 0.0
    %76 = vmatpush1.msra.mxu0 %v35
    %77 = vmatprep.subr.mxu0 0.0
    %78 = vmatpush1.msra.mxu0 %v34
    %79 = vmatprep.subr.mxu0 0.0
    %80 = vmatpush1.msra.mxu0 %v33
    %81 = vmatprep.subr.mxu0 0.0
    %82 = vmatpush2.msra.mxu0 0.0
    %83 = vmatprep.subr.mxu0 0.0
    %84 = vmatpush2.msra.mxu0 0.0
    %85 = vmatprep.subr.mxu0 0.0
    %86 = vmatpush2.msra.mxu0 0.0
    %87 = vmatprep.subr.mxu0 0.0
    %88 = vmatpush2.msra.mxu0 0.0
    %89 = vmatprep.subr.mxu0 0.0
    %90 = vmatpush2.msra.mxu0 0.0
    %91 = vmatprep.subr.mxu0 0.0
    %92 = vmatpush2.msra.mxu0 0.0
    %93 = vmatprep.subr.mxu0 0.0
    %94 = vmatpush2.msra.mxu0 0.0
    %95 = vmatprep.subr.mxu0 0.0
    %96 = vmatpush2.msra.mxu0 0.0
    %97 = vmatprep.subr.mxu0 0.0
    %98 = vmatpush2.msra.mxu0 0.0
    %99 = vmatprep.subr.mxu0 0.0
    %100 = vmatpush2.msra.mxu0 0.0
    %101 = vmatprep.subr.mxu0 0.0
    %102 = vmatpush2.msra.mxu0 0.0
    %103 = vmatprep.subr.mxu0 0.0
    %104 = vmatpush2.msra.mxu0 0.0
    %105 = vmatprep.subr.mxu0 0.0
    %106 = vmatpush2.msra.mxu0 0.0
    %107 = vmatprep.subr.mxu0 0.0
    %108 = vmatpush2.msra.mxu0 0.0
    %109 = vmatprep.subr.mxu0 0.0
    %110 = vmatpush2.msra.mxu0 0.0
    %111 = vmatprep.subr.mxu0 0.0
    %112 = vmatpush2.msra.mxu0 0.0
    %113 = vmatprep.mubr.f32.mxu0 0.0
    %114 = vmatmul.mubr.f32.gmra.mxu0 %v32
    %v115 = vpop.f32.mrf.mxu0
    %v116 = vadd.f32 0.0, %v115
    %v117 = vpop.f32.mrf.mxu0
    %118 = vdwg.mxu0
    %v119 = vadd.f32 %v31, %v116
    %120 = vst [vmem:[#allocation2] sm:$0xff] %v119
    // Predicated region
    $region18: #{nn_classifier_forward.1} parent=1 // pred_check
      %p121 = pneg %p26
    $region19: #{nn_classifier_forward.1} parent=1 // pred_check_branch
      %123 = sbr.rel (%p121) target = $region21
    $region20: #{nn_classifier_forward.1} parent=1 // pred_region
      %v124 = vld [vmem:[#allocation2] sm:$0xff]
      %125 = vst [vmem:[#allocation6] sm:$0xff] %v124
    $region21: #{nn_classifier_forward.1} parent=1 // pred_fallthru
      _
    // Predicated region
    $region22: #{nn_classifier_forward.1} parent=1 // pred_check
      _
    $region23: #{nn_classifier_forward.1} parent=1 // pred_check_branch
      %127 = sbr.rel (0) target = $region25
    $region24: #{nn_classifier_forward.1} parent=1 // pred_region
      %s129 = ssub.s32 128, 128
      %130 = vsyncadd [#allocation5], %s129
      %s132 = sshll.u32 [#allocation6], 4
      %s133 = int_to_ptr.vmem [resolvable:$true] %s132
      %135 = dma.vmem_to_hbm [thread:$0]  %s133, 128, %s2, [#allocation5]
    $region25: #{nn_classifier_forward.1} parent=1 // pred_fallthru
      _
    // Predicated region
    $region26: #{nn_classifier_forward.1} parent=1 // pred_check
      _
    $region27: #{nn_classifier_forward.1} parent=1 // pred_check_branch
      %137 = sbr.rel (0) target = $region29
    $region28: #{nn_classifier_forward.1} parent=1 // pred_region
      %138 = dma.done [#allocation5], 128
    $region29: #{nn_classifier_forward.1} parent=1 // pred_fallthru
      _
    %139 = vsyncpa [#allocation4], 1
    %140 = vsyncpa [#allocation5], 1

</llo_original>
